<compile_context>
chip_gen: v7x
topology: tpu7x:2x2x1
jax: 0.10.0
libtpu: 0.0.40
codegen_flags: <defaults>
</compile_context>

<pallas_src>
import functools

import jax
import jax.numpy as jnp
from jax.experimental import pallas as pl
from jax.experimental.pallas import tpu as pltpu


def _full_spec(shape):
    """BlockSpec covering the whole array (block_shape == array shape), grid=(1,)."""
    nd = len(shape)
    return pl.BlockSpec(shape, lambda i, _nd=nd: (0,) * _nd)


# --------------------------- fused forward kernel ----------------------------

def _make_fused_kernel(num_layers, hidden_size):
    H = hidden_size

    def kernel(*refs):
        # refs layout:
        #   x, (wih_t, b) * num_layers, bn_gamma, bn_beta, fc_w_t, fc_b, out
        x_ref = refs[0]
        idx = 1
        h = x_ref[...]                                        # (B, D_in)

        for _layer in range(num_layers):
            wih_ref = refs[idx]                               # (D_in, 8H)  [fwd|bwd]
            b_ref = refs[idx + 1]                             # (1, 8H)     b_ih + b_hh
            idx += 2

            # One 8H-wide matmul covers both directions (W_hh term is exactly 0).
            gates = (jnp.dot(h, wih_ref[...], preferred_element_type=jnp.float32)
                     + b_ref[...])                            # (B, 8H)
            sig = jax.nn.sigmoid(gates)                       # full-block EUP
            th = jnp.tanh(gates)

            hs = []
            for d in range(2):                                # PyTorch gate order i,f,g,o
                base = d * 4 * H
                i_g = sig[:, base + 0 * H: base + 1 * H]
                g_g = th[:, base + 2 * H: base + 3 * H]
                o_g = sig[:, base + 3 * H: base + 4 * H]
                c_new = i_g * g_g                             # f*c_prev == 0 (c0 = 0)
                hs.append(o_g * jnp.tanh(c_new))
            h = jnp.concatenate(hs, axis=-1)                  # (B, 2H)
            # inter-layer LSTM dropout: identity (eval semantics)

        gamma_ref, beta_ref, fcw_ref, fcb_ref, out_ref = refs[idx: idx + 5]

        # BatchNorm1d with batch statistics (biased variance, eps=1e-5), fused in VMEM.
        mean = jnp.mean(h, axis=0, keepdims=True)
        var = jnp.mean((h - mean) ** 2, axis=0, keepdims=True)
        xhat = (h - mean) * jax.lax.rsqrt(var + 1e-5)
        y = xhat * gamma_ref[...] + beta_ref[...]

        # Dropout: identity.  Final Linear.
        out_ref[...] = (jnp.dot(y, fcw_ref[...], preferred_element_type=jnp.float32)
                        + fcb_ref[...])

    return kernel


def bilstm_forward(params, x, *, hidden_size, num_layers):
    """Matches BiLSTM.forward: x (B, D) -> logits (B, num_classes)."""
    B = x.shape[0]
    C = params["fc_w_t"].shape[1]

    inputs = [x]
    for layer in range(num_layers):
        lp = params["lstm"][layer]
        inputs += [lp["wih_t"], lp["b"]]
    inputs += [params["bn_gamma"], params["bn_beta"], params["fc_w_t"], params["fc_b"]]

    kernel = _make_fused_kernel(num_layers, hidden_size)
    return pl.pallas_call(
        kernel,
        grid=(1,),
        in_specs=[_full_spec(a.shape) for a in inputs],
        out_specs=_full_spec((B, C)),
        out_shape=jax.ShapeDtypeStruct((B, C), jnp.float32),
        compiler_params=pltpu.CompilerParams(dimension_semantics=("arbitrary",)),
    )(*inputs)


# ------------------------------- params --------------------------------------

def init_params(key, input_size, hidden_size, num_layers, num_classes):
    """PyTorch-style init, pre-packed for the fused kernel:
       wih_t: (D_in, 8H) = [fwd W_ih^T | bwd W_ih^T],  b: (1, 8H) = b_ih + b_hh per dir."""
    H = hidden_size
    scale = 1.0 / float(H) ** 0.5
    params = {"lstm": []}
    for layer in range(num_layers):
        d_in = input_size if layer == 0 else 2 * H
        wih_ts, bs = [], []
        for _direction in range(2):
            key, k1, k2, k3, k4 = jax.random.split(key, 5)
            wih = jax.random.uniform(k1, (4 * H, d_in), jnp.float32, -scale, scale)
            # W_hh is part of the PyTorch parameterization but contributes exactly 0
            # (h0 = 0, seq_len = 1); sampled only to keep the RNG stream identical.
            _whh = jax.random.uniform(k2, (4 * H, H), jnp.float32, -scale, scale)
            bih = jax.random.uniform(k3, (4 * H,), jnp.float32, -scale, scale)
            bhh = jax.random.uniform(k4, (4 * H,), jnp.float32, -scale, scale)
            wih_ts.append(wih.T)              # (d_in, 4H)
            bs.append(bih + bhh)              # (4H,)
        params["lstm"].append({
            "wih_t": jnp.concatenate(wih_ts, axis=1),        # (d_in, 8H)
            "b": jnp.concatenate(bs).reshape(1, -1),         # (1, 8H)
        })
    params["bn_gamma"] = jnp.ones((1, 2 * H), jnp.float32)
    params["bn_beta"] = jnp.zeros((1, 2 * H), jnp.float32)
    fscale = 1.0 / float(2 * H) ** 0.5
    key, kw, kb = jax.random.split(key, 3)
    params["fc_w_t"] = jax.random.uniform(
        kw, (num_classes, 2 * H), jnp.float32, -fscale, fscale).T     # (2H, C)
    params["fc_b"] = jax.random.uniform(
        kb, (num_classes,), jnp.float32, -fscale, fscale).reshape(1, -1)
    return params


if __name__ == "__main__":
    B, input_size, hidden_size, num_layers, num_classes = 2, 16, 32, 2, 8

    key = jax.random.PRNGKey(0)
    kx, kp = jax.random.split(key)
    x = jax.random.normal(kx, (B, input_size), dtype=jnp.float32)
    params = init_params(kp, input_size, hidden_size, num_layers, num_classes)

    fwd = jax.jit(functools.partial(bilstm_forward,
                                    hidden_size=hidden_size,
                                    num_layers=num_layers))
    out = fwd(params, x)
    jax.block_until_ready(out)
    assert out.shape == (B, num_classes)
    assert out.dtype == jnp.float32
    print("KERNEL_OK")
</pallas_src>

<mosaic_0001>
module attributes {stable_mosaic.version = 11 : i64} {
  func.func @kernel(%arg0: i32, %arg1: memref<2x16xf32, #tpu.memory_space<vmem>>, %arg2: memref<16x256xf32, #tpu.memory_space<vmem>>, %arg3: memref<1x256xf32, #tpu.memory_space<vmem>>, %arg4: memref<64x256xf32, #tpu.memory_space<vmem>>, %arg5: memref<1x256xf32, #tpu.memory_space<vmem>>, %arg6: memref<1x64xf32, #tpu.memory_space<vmem>>, %arg7: memref<1x64xf32, #tpu.memory_space<vmem>>, %arg8: memref<64x8xf32, #tpu.memory_space<vmem>>, %arg9: memref<1x8xf32, #tpu.memory_space<vmem>>, %arg10: memref<2x8xf32, #tpu.memory_space<vmem>>) attributes {dimension_semantics = [#tpu.dimension_semantics<arbitrary>], iteration_bounds = array<i64: 1>, scalar_prefetch = 0 : i64, scratch_operands = 0 : i64, tpu.core_type = #tpu.core_type<tc>, window_params = [{pipeline_mode = #tpu.pipeline_mode<synchronous>, transform_indices = @transform_0, window_bounds = array<i64: 2, 16>}, {pipeline_mode = #tpu.pipeline_mode<synchronous>, transform_indices = @transform_1, window_bounds = array<i64: 16, 256>}, {pipeline_mode = #tpu.pipeline_mode<synchronous>, transform_indices = @transform_2, window_bounds = array<i64: 1, 256>}, {pipeline_mode = #tpu.pipeline_mode<synchronous>, transform_indices = @transform_3, window_bounds = array<i64: 64, 256>}, {pipeline_mode = #tpu.pipeline_mode<synchronous>, transform_indices = @transform_4, window_bounds = array<i64: 1, 256>}, {pipeline_mode = #tpu.pipeline_mode<synchronous>, transform_indices = @transform_5, window_bounds = array<i64: 1, 64>}, {pipeline_mode = #tpu.pipeline_mode<synchronous>, transform_indices = @transform_6, window_bounds = array<i64: 1, 64>}, {pipeline_mode = #tpu.pipeline_mode<synchronous>, transform_indices = @transform_7, window_bounds = array<i64: 64, 8>}, {pipeline_mode = #tpu.pipeline_mode<synchronous>, transform_indices = @transform_8, window_bounds = array<i64: 1, 8>}, {pipeline_mode = #tpu.pipeline_mode<synchronous>, transform_indices = @transform_9, window_bounds = array<i64: 2, 8>}]} {
    %c0 = arith.constant 0 : index
    %c0_0 = arith.constant 0 : index
    %0 = vector.load %arg1[%c0, %c0_0] : memref<2x16xf32, #tpu.memory_space<vmem>>, vector<2x16xf32>
    %c0_1 = arith.constant 0 : index
    %c0_2 = arith.constant 0 : index
    %1 = vector.load %arg2[%c0_1, %c0_2] : memref<16x256xf32, #tpu.memory_space<vmem>>, vector<16x256xf32>
    %cst = arith.constant dense<0.000000e+00> : vector<2x256xf32>
    %2 = tpu.matmul %0, %1, %cst {dimension_numbers = #tpu.dot_dimension_numbers<[1], [0], [0], [1], [0, 0, 1, 1], [], []>} : vector<2x16xf32>, vector<16x256xf32>, vector<2x256xf32> -> vector<2x256xf32>
    %c0_3 = arith.constant 0 : index
    %c0_4 = arith.constant 0 : index
    %3 = vector.load %arg3[%c0_3, %c0_4] : memref<1x256xf32, #tpu.memory_space<vmem>>, vector<1x256xf32>
    %4 = vector.broadcast %3 : vector<1x256xf32> to vector<2x256xf32>
    %5 = arith.addf %2, %4 : vector<2x256xf32>
    %6 = arith.negf %5 : vector<2x256xf32>
    %7 = math.exp %6 : vector<2x256xf32>
    %cst_5 = arith.constant 1.000000e+00 : f32
    %8 = vector.broadcast %cst_5 : f32 to vector<2x256xf32>
    %9 = arith.addf %8, %7 : vector<2x256xf32>
    %10 = arith.divf %8, %9 : vector<2x256xf32>
    %11 = math.tanh %5 : vector<2x256xf32>
    %12 = vector.extract_strided_slice %10 {offsets = [0, 0], sizes = [2, 32], strides = [1, 1]} : vector<2x256xf32> to vector<2x32xf32>
    %13 = vector.extract_strided_slice %11 {offsets = [0, 64], sizes = [2, 32], strides = [1, 1]} : vector<2x256xf32> to vector<2x32xf32>
    %14 = vector.extract_strided_slice %10 {offsets = [0, 96], sizes = [2, 32], strides = [1, 1]} : vector<2x256xf32> to vector<2x32xf32>
    %15 = arith.mulf %12, %13 : vector<2x32xf32>
    %16 = math.tanh %15 : vector<2x32xf32>
    %17 = arith.mulf %14, %16 : vector<2x32xf32>
    %18 = vector.extract_strided_slice %10 {offsets = [0, 128], sizes = [2, 32], strides = [1, 1]} : vector<2x256xf32> to vector<2x32xf32>
    %19 = vector.extract_strided_slice %11 {offsets = [0, 192], sizes = [2, 32], strides = [1, 1]} : vector<2x256xf32> to vector<2x32xf32>
    %20 = vector.extract_strided_slice %10 {offsets = [0, 224], sizes = [2, 32], strides = [1, 1]} : vector<2x256xf32> to vector<2x32xf32>
    %21 = arith.mulf %18, %19 : vector<2x32xf32>
    %22 = math.tanh %21 : vector<2x32xf32>
    %23 = arith.mulf %20, %22 : vector<2x32xf32>
    %24 = tpu.concatenate %17, %23 in 1 : vector<2x32xf32>, vector<2x32xf32> -> vector<2x64xf32>
    %c0_6 = arith.constant 0 : index
    %c0_7 = arith.constant 0 : index
    %25 = vector.load %arg4[%c0_6, %c0_7] : memref<64x256xf32, #tpu.memory_space<vmem>>, vector<64x256xf32>
    %cst_8 = arith.constant dense<0.000000e+00> : vector<2x256xf32>
    %26 = tpu.matmul %24, %25, %cst_8 {dimension_numbers = #tpu.dot_dimension_numbers<[1], [0], [0], [1], [0, 0, 1, 1], [], []>} : vector<2x64xf32>, vector<64x256xf32>, vector<2x256xf32> -> vector<2x256xf32>
    %c0_9 = arith.constant 0 : index
    %c0_10 = arith.constant 0 : index
    %27 = vector.load %arg5[%c0_9, %c0_10] : memref<1x256xf32, #tpu.memory_space<vmem>>, vector<1x256xf32>
    %28 = vector.broadcast %27 : vector<1x256xf32> to vector<2x256xf32>
    %29 = arith.addf %26, %28 : vector<2x256xf32>
    %30 = arith.negf %29 : vector<2x256xf32>
    %31 = math.exp %30 : vector<2x256xf32>
    %cst_11 = arith.constant 1.000000e+00 : f32
    %32 = vector.broadcast %cst_11 : f32 to vector<2x256xf32>
    %33 = arith.addf %32, %31 : vector<2x256xf32>
    %34 = arith.divf %32, %33 : vector<2x256xf32>
    %35 = math.tanh %29 : vector<2x256xf32>
    %36 = vector.extract_strided_slice %34 {offsets = [0, 0], sizes = [2, 32], strides = [1, 1]} : vector<2x256xf32> to vector<2x32xf32>
    %37 = vector.extract_strided_slice %35 {offsets = [0, 64], sizes = [2, 32], strides = [1, 1]} : vector<2x256xf32> to vector<2x32xf32>
    %38 = vector.extract_strided_slice %34 {offsets = [0, 96], sizes = [2, 32], strides = [1, 1]} : vector<2x256xf32> to vector<2x32xf32>
    %39 = arith.mulf %36, %37 : vector<2x32xf32>
    %40 = math.tanh %39 : vector<2x32xf32>
    %41 = arith.mulf %38, %40 : vector<2x32xf32>
    %42 = vector.extract_strided_slice %34 {offsets = [0, 128], sizes = [2, 32], strides = [1, 1]} : vector<2x256xf32> to vector<2x32xf32>
    %43 = vector.extract_strided_slice %35 {offsets = [0, 192], sizes = [2, 32], strides = [1, 1]} : vector<2x256xf32> to vector<2x32xf32>
    %44 = vector.extract_strided_slice %34 {offsets = [0, 224], sizes = [2, 32], strides = [1, 1]} : vector<2x256xf32> to vector<2x32xf32>
    %45 = arith.mulf %42, %43 : vector<2x32xf32>
    %46 = math.tanh %45 : vector<2x32xf32>
    %47 = arith.mulf %44, %46 : vector<2x32xf32>
    %48 = tpu.concatenate %41, %47 in 1 : vector<2x32xf32>, vector<2x32xf32> -> vector<2x64xf32>
    %cst_12 = arith.constant dense<0.000000e+00> : vector<64xf32>
    %49 = vector.multi_reduction <add>, %48, %cst_12 [0] : vector<2x64xf32> to vector<64xf32>
    %50 = vector.shape_cast %49 : vector<64xf32> to vector<1x64xf32>
    %cst_13 = arith.constant 2.000000e+00 : f32
    %51 = vector.broadcast %cst_13 : f32 to vector<1x64xf32>
    %52 = arith.divf %50, %51 : vector<1x64xf32>
    %53 = vector.broadcast %52 : vector<1x64xf32> to vector<2x64xf32>
    %54 = arith.subf %48, %53 : vector<2x64xf32>
    %55 = arith.mulf %54, %54 : vector<2x64xf32>
    %cst_14 = arith.constant dense<0.000000e+00> : vector<64xf32>
    %56 = vector.multi_reduction <add>, %55, %cst_14 [0] : vector<2x64xf32> to vector<64xf32>
    %57 = vector.shape_cast %56 : vector<64xf32> to vector<1x64xf32>
    %cst_15 = arith.constant 2.000000e+00 : f32
    %58 = vector.broadcast %cst_15 : f32 to vector<1x64xf32>
    %59 = arith.divf %57, %58 : vector<1x64xf32>
    %60 = vector.broadcast %52 : vector<1x64xf32> to vector<2x64xf32>
    %61 = arith.subf %48, %60 : vector<2x64xf32>
    %cst_16 = arith.constant 9.99999974E-6 : f32
    %62 = vector.broadcast %cst_16 : f32 to vector<1x64xf32>
    %63 = arith.addf %59, %62 : vector<1x64xf32>
    %64 = math.rsqrt %63 : vector<1x64xf32>
    %65 = vector.broadcast %64 : vector<1x64xf32> to vector<2x64xf32>
    %66 = arith.mulf %61, %65 : vector<2x64xf32>
    %c0_17 = arith.constant 0 : index
    %c0_18 = arith.constant 0 : index
    %67 = vector.load %arg6[%c0_17, %c0_18] : memref<1x64xf32, #tpu.memory_space<vmem>>, vector<1x64xf32>
    %68 = vector.broadcast %67 : vector<1x64xf32> to vector<2x64xf32>
    %69 = arith.mulf %66, %68 : vector<2x64xf32>
    %c0_19 = arith.constant 0 : index
    %c0_20 = arith.constant 0 : index
    %70 = vector.load %arg7[%c0_19, %c0_20] : memref<1x64xf32, #tpu.memory_space<vmem>>, vector<1x64xf32>
    %71 = vector.broadcast %70 : vector<1x64xf32> to vector<2x64xf32>
    %72 = arith.addf %69, %71 : vector<2x64xf32>
    %c0_21 = arith.constant 0 : index
    %c0_22 = arith.constant 0 : index
    %73 = vector.load %arg8[%c0_21, %c0_22] : memref<64x8xf32, #tpu.memory_space<vmem>>, vector<64x8xf32>
    %cst_23 = arith.constant dense<0.000000e+00> : vector<2x8xf32>
    %74 = tpu.matmul %72, %73, %cst_23 {dimension_numbers = #tpu.dot_dimension_numbers<[1], [0], [0], [1], [0, 0, 1, 1], [], []>} : vector<2x64xf32>, vector<64x8xf32>, vector<2x8xf32> -> vector<2x8xf32>
    %c0_24 = arith.constant 0 : index
    %c0_25 = arith.constant 0 : index
    %75 = vector.load %arg9[%c0_24, %c0_25] : memref<1x8xf32, #tpu.memory_space<vmem>>, vector<1x8xf32>
    %76 = vector.broadcast %75 : vector<1x8xf32> to vector<2x8xf32>
    %77 = arith.addf %74, %76 : vector<2x8xf32>
    %c0_26 = arith.constant 0 : index
    %c0_27 = arith.constant 0 : index
    %78 = vector.load %arg10[%c0_26, %c0_27] : memref<2x8xf32, #tpu.memory_space<vmem>>, vector<2x8xf32>
    tpu.vector_store %arg10[%c0_26, %c0_27], %77 {strides = array<i32>} : memref<2x8xf32, #tpu.memory_space<vmem>>, vector<2x8xf32>,
    return
  }
  func.func @transform_0(%arg0: i32) -> (i32, i32) {
    %c0_i32 = arith.constant 0 : i32
    %c0_i32_0 = arith.constant 0 : i32
    %c0_i32_1 = arith.constant 0 : i32
    return %c0_i32, %c0_i32_0 : i32, i32
  }
  func.func @transform_1(%arg0: i32) -> (i32, i32) {
    %c0_i32 = arith.constant 0 : i32
    %c0_i32_0 = arith.constant 0 : i32
    %c0_i32_1 = arith.constant 0 : i32
    return %c0_i32, %c0_i32_0 : i32, i32
  }
  func.func @transform_2(%arg0: i32) -> (i32, i32) {
    %c0_i32 = arith.constant 0 : i32
    %c0_i32_0 = arith.constant 0 : i32
    %c0_i32_1 = arith.constant 0 : i32
    return %c0_i32, %c0_i32_0 : i32, i32
  }
  func.func @transform_3(%arg0: i32) -> (i32, i32) {
    %c0_i32 = arith.constant 0 : i32
    %c0_i32_0 = arith.constant 0 : i32
    %c0_i32_1 = arith.constant 0 : i32
    return %c0_i32, %c0_i32_0 : i32, i32
  }
  func.func @transform_4(%arg0: i32) -> (i32, i32) {
    %c0_i32 = arith.constant 0 : i32
    %c0_i32_0 = arith.constant 0 : i32
    %c0_i32_1 = arith.constant 0 : i32
    return %c0_i32, %c0_i32_0 : i32, i32
  }
  func.func @transform_5(%arg0: i32) -> (i32, i32) {
    %c0_i32 = arith.constant 0 : i32
    %c0_i32_0 = arith.constant 0 : i32
    %c0_i32_1 = arith.constant 0 : i32
    return %c0_i32, %c0_i32_0 : i32, i32
  }
  func.func @transform_6(%arg0: i32) -> (i32, i32) {
    %c0_i32 = arith.constant 0 : i32
    %c0_i32_0 = arith.constant 0 : i32
    %c0_i32_1 = arith.constant 0 : i32
    return %c0_i32, %c0_i32_0 : i32, i32
  }
  func.func @transform_7(%arg0: i32) -> (i32, i32) {
    %c0_i32 = arith.constant 0 : i32
    %c0_i32_0 = arith.constant 0 : i32
    %c0_i32_1 = arith.constant 0 : i32
    return %c0_i32, %c0_i32_0 : i32, i32
  }
  func.func @transform_8(%arg0: i32) -> (i32, i32) {
    %c0_i32 = arith.constant 0 : i32
    %c0_i32_0 = arith.constant 0 : i32
    %c0_i32_1 = arith.constant 0 : i32
    return %c0_i32, %c0_i32_0 : i32, i32
  }
  func.func @transform_9(%arg0: i32) -> (i32, i32) {
    %c0_i32 = arith.constant 0 : i32
    %c0_i32_0 = arith.constant 0 : i32
    %c0_i32_1 = arith.constant 0 : i32
    return %c0_i32, %c0_i32_0 : i32, i32
  }
}

</mosaic_0001>

<llo_original>
// kernel: bilstm_forward.1
$region0: #{bilstm_forward.1}
  #allocation0 [shape = 'u32[]', space=smem, size = 0x4, offset = 0x4, fixed_abs, tag = 'smem constant byte address 0x4 - core index']
  #allocation1 [shape = 'u32[144,128]{1,0:T(1,128)}', space=vmem, size = 0x12000, scoped, tag = 'internal scratch']
  %s0 = inlined_call_operand.vmem [shape: f32[2,16], index: 0, kind: input, shape index: {}]
  %s1 = inlined_call_operand.vmem [shape: f32[16,256], index: 1, kind: input, shape index: {}]
  %s2 = inlined_call_operand.vmem [shape: f32[1,256], index: 2, kind: input, shape index: {}]
  %s3 = inlined_call_operand.hbm [shape: f32[64,256], index: 3, kind: input, shape index: {}]
  %s4 = inlined_call_operand.vmem [shape: f32[1,256], index: 4, kind: input, shape index: {}]
  %s5 = inlined_call_operand.vmem [shape: f32[1,64], index: 5, kind: input, shape index: {}]
  %s6 = inlined_call_operand.vmem [shape: f32[1,64], index: 6, kind: input, shape index: {}]
  %s7 = inlined_call_operand.vmem [shape: f32[64,8], index: 7, kind: input, shape index: {}]
  %s8 = inlined_call_operand.vmem [shape: f32[1,8], index: 8, kind: input, shape index: {}]
  %s9 = inlined_call_operand.hbm [shape: f32[2,8], index: 9, kind: output, shape index: {}]
  %s10 = sld [smem:[#allocation0]]
  $region50: #{bilstm_forward.1} parent=0
    _
  %s12 = ssub.s32 1, %s10
  %s13 = scalar_select 0, %s12, %s10
  $region1: #{bilstm_forward.1} parent=0
    #allocation2 [shape = 'u8[65536]{0}', space=vmem, size = 0x10000, scoped, tag = 'input window, operand 3, single buffered']
    #allocation3 [shape = 's32[1]{0}', space=sflag, size = 0x4, scoped, tag = 'scoped memory for bilstm_forward.1']
    #allocation4 [shape = 's32[1]{0}', space=sflag, size = 0x4, scoped, tag = 'scoped memory for bilstm_forward.1']
    #allocation5 [shape = 'u8[1024]{0}', space=vmem, size = 0x400, scoped, tag = 'output window, operand 0, single buffered']
    %14 = vsyncpa [#allocation3], 0
    %15 = vsyncpa [#allocation4], 0
    // Predicated region
    $region2: #{bilstm_forward.1} parent=1 // pred_check
      _
    $region3: #{bilstm_forward.1} parent=1 // pred_check_branch
      %17 = sbr.rel (0) target = $region5
    $region4: #{bilstm_forward.1} parent=1 // pred_region
      _
    $region5: #{bilstm_forward.1} parent=1 // pred_fallthru
      _
    // Predicated region
    $region6: #{bilstm_forward.1} parent=1 // pred_check
      _
    $region7: #{bilstm_forward.1} parent=1 // pred_check_branch
      %19 = sbr.rel (0) target = $region9
    $region8: #{bilstm_forward.1} parent=1 // pred_region
      _
    $region9: #{bilstm_forward.1} parent=1 // pred_fallthru
      _
    // Predicated region
    $region10: #{bilstm_forward.1} parent=1 // pred_check
      _
    $region11: #{bilstm_forward.1} parent=1 // pred_check_branch
      %21 = sbr.rel (0) target = $region13
    $region12: #{bilstm_forward.1} parent=1 // pred_region
      _
    $region13: #{bilstm_forward.1} parent=1 // pred_fallthru
      _
    // Predicated region
    $region14: #{bilstm_forward.1} parent=1 // pred_check
      _
    $region15: #{bilstm_forward.1} parent=1 // pred_check_branch
      %23 = sbr.rel (0) target = $region17
    $region16: #{bilstm_forward.1} parent=1 // pred_region
      %s25 = ssub.s32 2048, 2048
      %26 = vsyncadd [#allocation3], %s25
      %s27 = sshll.u32 [#allocation2], 4
      %s28 = int_to_ptr.vmem [resolvable:$true] %s27
      %33 = dma.hbm_to_vmem [thread:$0]  %s3, 2048, %s28, [#allocation3], 256, 256, 16
    $region17: #{bilstm_forward.1} parent=1 // pred_fallthru
      _
    // Predicated region
    $region18: #{bilstm_forward.1} parent=1 // pred_check
      _
    $region19: #{bilstm_forward.1} parent=1 // pred_check_branch
      %35 = sbr.rel (0) target = $region21
    $region20: #{bilstm_forward.1} parent=1 // pred_region
      _
    $region21: #{bilstm_forward.1} parent=1 // pred_fallthru
      _
    // Predicated region
    $region22: #{bilstm_forward.1} parent=1 // pred_check
      _
    $region23: #{bilstm_forward.1} parent=1 // pred_check_branch
      %37 = sbr.rel (0) target = $region25
    $region24: #{bilstm_forward.1} parent=1 // pred_region
      _
    $region25: #{bilstm_forward.1} parent=1 // pred_fallthru
      _
    // Predicated region
    $region26: #{bilstm_forward.1} parent=1 // pred_check
      _
    $region27: #{bilstm_forward.1} parent=1 // pred_check_branch
      %39 = sbr.rel (0) target = $region29
    $region28: #{bilstm_forward.1} parent=1 // pred_region
      _
    $region29: #{bilstm_forward.1} parent=1 // pred_fallthru
      _
    // Predicated region
    $region30: #{bilstm_forward.1} parent=1 // pred_check
      _
    $region31: #{bilstm_forward.1} parent=1 // pred_check_branch
      %41 = sbr.rel (0) target = $region33
    $region32: #{bilstm_forward.1} parent=1 // pred_region
      _
    $region33: #{bilstm_forward.1} parent=1 // pred_fallthru
      _
    // Predicated region
    $region34: #{bilstm_forward.1} parent=1 // pred_check
      _
    $region35: #{bilstm_forward.1} parent=1 // pred_check_branch
      %43 = sbr.rel (0) target = $region37
    $region36: #{bilstm_forward.1} parent=1 // pred_region
      _
    $region37: #{bilstm_forward.1} parent=1 // pred_fallthru
      _
    // Predicated region
    $region38: #{bilstm_forward.1} parent=1 // pred_check
      _
    $region39: #{bilstm_forward.1} parent=1 // pred_check_branch
      %45 = sbr.rel (0) target = $region41
    $region40: #{bilstm_forward.1} parent=1 // pred_region
      %46 = dma.done [#allocation3], 2048
    $region41: #{bilstm_forward.1} parent=1 // pred_fallthru
      _
    %v47 = vld [vmem:[%s0] sm:$0x3]
    %v48 = vld [vmem:[%s1] sm:$0xff]
    %v49 = vld [vmem:[%s1 + $0x8] sm:$0xff]
    %v50 = vld [vmem:[%s1 + $0x10] sm:$0xff]
    %v51 = vld [vmem:[%s1 + $0x18] sm:$0xff]
    %v52 = vld [vmem:[%s2] sm:$0x3]
    %v54 = vlaneseq
    %v55 = vshrl.u32 %v54, 7
    %v56 = vsub.s32 0, %v55
    %v57 = vrot.slane %v52, %v56
    %v58 = vlaneseq
    %v59 = vshrl.u32 %v58, 7
    %v60 = vsub.s32 1, %v59
    %v61 = vrot.slane %v52, %v60
    %vm64 = vcmask 130048
    %v66 = vsel %vm64, %v47, 0
    %68 = vmatprep.subr.mxu0 %v49
    %69 = vmatpush1.msra.mxu0 %v48
    %70 = vmatprep.subr.mxu0 %v51
    %71 = vmatpush1.msra.mxu0 %v50
    %72 = vmatprep.subr.mxu0 0.0
    %73 = vmatpush1.msra.mxu0 0.0
    %74 = vmatprep.subr.mxu0 0.0
    %75 = vmatpush1.msra.mxu0 0.0
    %76 = vmatprep.subr.mxu0 0.0
    %77 = vmatpush1.msra.mxu0 0.0
    %78 = vmatprep.subr.mxu0 0.0
    %79 = vmatpush1.msra.mxu0 0.0
    %80 = vmatprep.subr.mxu0 0.0
    %81 = vmatpush1.msra.mxu0 0.0
    %82 = vmatprep.subr.mxu0 0.0
    %83 = vmatpush1.msra.mxu0 0.0
    %84 = vmatprep.subr.mxu0 0.0
    %85 = vmatpush1.msra.mxu0 0.0
    %86 = vmatprep.subr.mxu0 0.0
    %87 = vmatpush1.msra.mxu0 0.0
    %88 = vmatprep.subr.mxu0 0.0
    %89 = vmatpush1.msra.mxu0 0.0
    %90 = vmatprep.subr.mxu0 0.0
    %91 = vmatpush1.msra.mxu0 0.0
    %92 = vmatprep.subr.mxu0 0.0
    %93 = vmatpush1.msra.mxu0 0.0
    %94 = vmatprep.subr.mxu0 0.0
    %95 = vmatpush1.msra.mxu0 0.0
    %96 = vmatprep.subr.mxu0 0.0
    %97 = vmatpush1.msra.mxu0 0.0
    %98 = vmatprep.subr.mxu0 0.0
    %99 = vmatpush1.msra.mxu0 0.0
    %100 = vmatprep.subr.mxu0 0.0
    %101 = vmatpush1.msra.mxu0 0.0
    %102 = vmatprep.subr.mxu0 0.0
    %103 = vmatpush1.msra.mxu0 0.0
    %104 = vmatprep.subr.mxu0 0.0
    %105 = vmatpush1.msra.mxu0 0.0
    %106 = vmatprep.subr.mxu0 0.0
    %107 = vmatpush1.msra.mxu0 0.0
    %108 = vmatprep.subr.mxu0 0.0
    %109 = vmatpush1.msra.mxu0 0.0
    %110 = vmatprep.subr.mxu0 0.0
    %111 = vmatpush1.msra.mxu0 0.0
    %112 = vmatprep.subr.mxu0 0.0
    %113 = vmatpush1.msra.mxu0 0.0
    %114 = vmatprep.subr.mxu0 0.0
    %115 = vmatpush1.msra.mxu0 0.0
    %116 = vmatprep.subr.mxu0 0.0
    %117 = vmatpush1.msra.mxu0 0.0
    %118 = vmatprep.subr.mxu0 0.0
    %119 = vmatpush1.msra.mxu0 0.0
    %120 = vmatprep.subr.mxu0 0.0
    %121 = vmatpush1.msra.mxu0 0.0
    %122 = vmatprep.subr.mxu0 0.0
    %123 = vmatpush1.msra.mxu0 0.0
    %124 = vmatprep.subr.mxu0 0.0
    %125 = vmatpush1.msra.mxu0 0.0
    %126 = vmatprep.subr.mxu0 0.0
    %127 = vmatpush1.msra.mxu0 0.0
    %128 = vmatprep.subr.mxu0 0.0
    %129 = vmatpush1.msra.mxu0 0.0
    %130 = vmatprep.subr.mxu0 0.0
    %131 = vmatpush1.msra.mxu0 0.0
    %132 = vmatprep.mubr.f32.mxu0 0.0
    %133 = vmatmul.mubr.f32.gmra.mrb[0].mxu0 %v66
    %v134 = vpop.f32.mrb[0].mxu0
    %v135 = vadd.f32 %v57, %v134
    %v136 = vpop.f32.mrb[0].mxu0
    %v137 = vadd.f32 %v61, %v136
    %138 = vdwg.mxu0
    %v139 = vxor.u32 %v135, 2147483648
    %v140 = vxor.u32 %v137, 2147483648
    %v141 = vmul.f32 %v139, 1.442695
    %v142 = vpow.pop %v141
    %v143 = vmul.f32 %v140, 1.442695
    %v144 = vpow.pop %v143
    %v145 = vadd.f32 %v142, 1.0
    %v146 = vadd.f32 %v144, 1.0
    %v147 = vrcp.pop %v145
    %v148 = vmul.f32 1.0, %v147
    %v149 = vrcp.pop %v146
    %v150 = vmul.f32 1.0, %v149
    %v151 = vtanh.pop %v135
    %v152 = vtanh.pop %v137
    %154 = vrot.lane.b32.xlu0 %v151, 64
    %v155 = vpop.permute.xlu0 %154
    %v157 = vmul.f32 %v148, %v155
    %v158 = vtanh.pop %v157
    %160 = vrot.lane.b32.xlu0 %v158, 96
    %v161 = vpop.permute.xlu0 %160
    %v163 = vmul.f32 %v148, %v161
    %165 = vrot.lane.b32.xlu0 %v152, 64
    %v166 = vpop.permute.xlu0 %165
    %v168 = vmul.f32 %v150, %v166
    %v169 = vtanh.pop %v168
    %171 = vrot.lane.b32.xlu0 %v169, 96
    %v172 = vpop.permute.xlu0 %171
    %v174 = vmul.f32 %v150, %v172
    %176 = vrot.lane.b32.xlu0 %v163, 32
    %v177 = vpop.permute.xlu0 %176
    %180 = vrot.lane.b32.xlu0 %v174, 64
    %v181 = vpop.permute.xlu0 %180
    %vm183 = vcmask 261120
    %v184 = vsel %vm183, %v177, %v181
    %v185 = vld [vmem:[#allocation2] sm:$0xff]
    %v186 = vld [vmem:[#allocation2 + $0x8] sm:$0xff]
    %v187 = vld [vmem:[#allocation2 + $0x10] sm:$0xff]
    %v188 = vld [vmem:[#allocation2 + $0x18] sm:$0xff]
    %v189 = vld [vmem:[#allocation2 + $0x20] sm:$0xff]
    %v190 = vld [vmem:[#allocation2 + $0x28] sm:$0xff]
    %v191 = vld [vmem:[#allocation2 + $0x30] sm:$0xff]
    %v192 = vld [vmem:[#allocation2 + $0x38] sm:$0xff]
    %v193 = vld [vmem:[#allocation2 + $0x40] sm:$0xff]
    %v194 = vld [vmem:[#allocation2 + $0x48] sm:$0xff]
    %v195 = vld [vmem:[#allocation2 + $0x50] sm:$0xff]
    %v196 = vld [vmem:[#allocation2 + $0x58] sm:$0xff]
    %v197 = vld [vmem:[#allocation2 + $0x60] sm:$0xff]
    %v198 = vld [vmem:[#allocation2 + $0x68] sm:$0xff]
    %v199 = vld [vmem:[#allocation2 + $0x70] sm:$0xff]
    %v200 = vld [vmem:[#allocation2 + $0x78] sm:$0xff]
    %v201 = vld [vmem:[%s4] sm:$0x3]
    %v203 = vlaneseq
    %v204 = vshrl.u32 %v203, 7
    %v205 = vsub.s32 0, %v204
    %v206 = vrot.slane %v201, %v205
    %v207 = vlaneseq
    %v208 = vshrl.u32 %v207, 7
    %v209 = vsub.s32 1, %v208
    %v210 = vrot.slane %v201, %v209
    %vm213 = vcmask 523264
    %v215 = vsel %vm213, %v184, 0
    %217 = vmatprep.subr.mxu0 %v186
    %218 = vmatpush1.msra.mxu0 %v185
    %219 = vmatprep.subr.mxu0 %v188
    %220 = vmatpush1.msra.mxu0 %v187
    %221 = vmatprep.subr.mxu0 %v190
    %222 = vmatpush1.msra.mxu0 %v189
    %223 = vmatprep.subr.mxu0 %v192
    %224 = vmatpush1.msra.mxu0 %v191
    %225 = vmatprep.subr.mxu0 %v194
    %226 = vmatpush1.msra.mxu0 %v193
    %227 = vmatprep.subr.mxu0 %v196
    %228 = vmatpush1.msra.mxu0 %v195
    %229 = vmatprep.subr.mxu0 %v198
    %230 = vmatpush1.msra.mxu0 %v197
    %231 = vmatprep.subr.mxu0 %v200
    %232 = vmatpush1.msra.mxu0 %v199
    %233 = vmatprep.subr.mxu0 0.0
    %234 = vmatpush1.msra.mxu0 0.0
    %235 = vmatprep.subr.mxu0 0.0
    %236 = vmatpush1.msra.mxu0 0.0
    %237 = vmatprep.subr.mxu0 0.0
    %238 = vmatpush1.msra.mxu0 0.0
    %239 = vmatprep.subr.mxu0 0.0
    %240 = vmatpush1.msra.mxu0 0.0
    %241 = vmatprep.subr.mxu0 0.0
    %242 = vmatpush1.msra.mxu0 0.0
    %243 = vmatprep.subr.mxu0 0.0
    %244 = vmatpush1.msra.mxu0 0.0
    %245 = vmatprep.subr.mxu0 0.0
    %246 = vmatpush1.msra.mxu0 0.0
    %247 = vmatprep.subr.mxu0 0.0
    %248 = vmatpush1.msra.mxu0 0.0
    %249 = vmatprep.subr.mxu0 0.0
    %250 = vmatpush1.msra.mxu0 0.0
    %251 = vmatprep.subr.mxu0 0.0
    %252 = vmatpush1.msra.mxu0 0.0
    %253 = vmatprep.subr.mxu0 0.0
    %254 = vmatpush1.msra.mxu0 0.0
    %255 = vmatprep.subr.mxu0 0.0
    %256 = vmatpush1.msra.mxu0 0.0
    %257 = vmatprep.subr.mxu0 0.0
    %258 = vmatpush1.msra.mxu0 0.0
    %259 = vmatprep.subr.mxu0 0.0
    %260 = vmatpush1.msra.mxu0 0.0
    %261 = vmatprep.subr.mxu0 0.0
    %262 = vmatpush1.msra.mxu0 0.0
    %263 = vmatprep.subr.mxu0 0.0
    %264 = vmatpush1.msra.mxu0 0.0
    %265 = vmatprep.subr.mxu0 0.0
    %266 = vmatpush1.msra.mxu0 0.0
    %267 = vmatprep.subr.mxu0 0.0
    %268 = vmatpush1.msra.mxu0 0.0
    %269 = vmatprep.subr.mxu0 0.0
    %270 = vmatpush1.msra.mxu0 0.0
    %271 = vmatprep.subr.mxu0 0.0
    %272 = vmatpush1.msra.mxu0 0.0
    %273 = vmatprep.subr.mxu0 0.0
    %274 = vmatpush1.msra.mxu0 0.0
    %275 = vmatprep.subr.mxu0 0.0
    %276 = vmatpush1.msra.mxu0 0.0
    %277 = vmatprep.subr.mxu0 0.0
    %278 = vmatpush1.msra.mxu0 0.0
    %279 = vmatprep.subr.mxu0 0.0
    %280 = vmatpush1.msra.mxu0 0.0
    %281 = vmatprep.mubr.f32.mxu0 0.0
    %282 = vmatmul.mubr.f32.gmra.mrb[0].mxu0 %v215
    %v283 = vpop.f32.mrb[0].mxu0
    %v284 = vadd.f32 %v206, %v283
    %v285 = vpop.f32.mrb[0].mxu0
    %v286 = vadd.f32 %v210, %v285
    %287 = vdwg.mxu0
    %v288 = vxor.u32 %v284, 2147483648
    %v289 = vxor.u32 %v286, 2147483648
    %v290 = vmul.f32 %v288, 1.442695
    %v291 = vpow.pop %v290
    %v292 = vmul.f32 %v289, 1.442695
    %v293 = vpow.pop %v292
    %v294 = vadd.f32 %v291, 1.0
    %v295 = vadd.f32 %v293, 1.0
    %v296 = vrcp.pop %v294
    %v297 = vmul.f32 1.0, %v296
    %v298 = vrcp.pop %v295
    %v299 = vmul.f32 1.0, %v298
    %v300 = vtanh.pop %v284
    %v301 = vtanh.pop %v286
    %303 = vrot.lane.b32.xlu0 %v300, 64
    %v304 = vpop.permute.xlu0 %303
    %v306 = vmul.f32 %v297, %v304
    %v307 = vtanh.pop %v306
    %309 = vrot.lane.b32.xlu0 %v307, 96
    %v310 = vpop.permute.xlu0 %309
    %v312 = vmul.f32 %v297, %v310
    %314 = vrot.lane.b32.xlu0 %v301, 64
    %v315 = vpop.permute.xlu0 %314
    %v317 = vmul.f32 %v299, %v315
    %v318 = vtanh.pop %v317
    %320 = vrot.lane.b32.xlu0 %v318, 96
    %v321 = vpop.permute.xlu0 %320
    %v323 = vmul.f32 %v299, %v321
    %325 = vrot.lane.b32.xlu0 %v312, 32
    %v326 = vpop.permute.xlu0 %325
    %329 = vrot.lane.b32.xlu0 %v323, 64
    %v330 = vpop.permute.xlu0 %329
    %v332 = vsel %vm183, %v326, %v330
    %vm333 = vcmask 517120
    %v334 = vsel %vm333, %v332, 0.0
    %v335 = vrot.slane %v334, 4
    %v336 = vadd.f32 %v334, %v335
    %v337 = vrot.slane %v336, 2
    %v338 = vadd.f32 %v336, %v337
    %v339 = vrot.slane %v338, 1
    %v340 = vadd.f32 %v338, %v339
    %v341 = vrcp.pop 2.0
    %v342 = vmul.f32 %v340, %v341
    %v343 = vsub.f32 %v332, %v342
    %v344 = vmul.f32 %v343, %v343
    %v345 = vsel %vm333, %v344, 0.0
    %v346 = vrot.slane %v345, 4
    %v347 = vadd.f32 %v345, %v346
    %v348 = vrot.slane %v347, 2
    %v349 = vadd.f32 %v347, %v348
    %v350 = vrot.slane %v349, 1
    %v351 = vadd.f32 %v349, %v350
    %v352 = vmul.f32 %v351, %v341
    %v353 = vadd.f32 %v352, 1e-05
    %v354 = vrsqrt.pop %v353
    %v355 = vmul.f32 %v343, %v354
    %v356 = vld [vmem:[%s5] sm:$0x1]
    %v358 = vlaneseq
    %v359 = vshrl.u32 %v358, 7
    %v360 = vsub.s32 0, %v359
    %v361 = vrot.slane %v356, %v360
    %v363 = vmul.f32 %v355, %v361
    %v364 = vld [vmem:[%s6] sm:$0x1]
    %v366 = vlaneseq
    %v367 = vshrl.u32 %v366, 7
    %v368 = vsub.s32 0, %v367
    %v369 = vrot.slane %v364, %v368
    %v371 = vadd.f32 %v363, %v369
    %v372 = vld [vmem:[%s7] sm:$0xff]
    %v373 = vld [vmem:[%s7 + $0x8] sm:$0xff]
    %v374 = vld [vmem:[%s7 + $0x10] sm:$0xff]
    %v375 = vld [vmem:[%s7 + $0x18] sm:$0xff]
    %v376 = vld [vmem:[%s7 + $0x20] sm:$0xff]
    %v377 = vld [vmem:[%s7 + $0x28] sm:$0xff]
    %v378 = vld [vmem:[%s7 + $0x30] sm:$0xff]
    %v379 = vld [vmem:[%s7 + $0x38] sm:$0xff]
    %v380 = vld [vmem:[%s8] sm:$0x1]
    %v382 = vlaneseq
    %v383 = vshrl.u32 %v382, 7
    %v384 = vsub.s32 0, %v383
    %v385 = vrot.slane %v380, %v384
    %v388 = vsel %vm213, %v371, 0
    %390 = vmatprep.subr.mxu0 0.0
    %391 = vmatpush1.msra.mxu0 %v372
    %392 = vmatprep.subr.mxu0 0.0
    %393 = vmatpush1.msra.mxu0 %v373
    %394 = vmatprep.subr.mxu0 0.0
    %395 = vmatpush1.msra.mxu0 %v374
    %396 = vmatprep.subr.mxu0 0.0
    %397 = vmatpush1.msra.mxu0 %v375
    %398 = vmatprep.subr.mxu0 0.0
    %399 = vmatpush1.msra.mxu0 %v376
    %400 = vmatprep.subr.mxu0 0.0
    %401 = vmatpush1.msra.mxu0 %v377
    %402 = vmatprep.subr.mxu0 0.0
    %403 = vmatpush1.msra.mxu0 %v378
    %404 = vmatprep.subr.mxu0 0.0
    %405 = vmatpush1.msra.mxu0 %v379
    %406 = vmatprep.subr.mxu0 0.0
    %407 = vmatpush1.msra.mxu0 0.0
    %408 = vmatprep.subr.mxu0 0.0
    %409 = vmatpush1.msra.mxu0 0.0
    %410 = vmatprep.subr.mxu0 0.0
    %411 = vmatpush1.msra.mxu0 0.0
    %412 = vmatprep.subr.mxu0 0.0
    %413 = vmatpush1.msra.mxu0 0.0
    %414 = vmatprep.subr.mxu0 0.0
    %415 = vmatpush1.msra.mxu0 0.0
    %416 = vmatprep.subr.mxu0 0.0
    %417 = vmatpush1.msra.mxu0 0.0
    %418 = vmatprep.subr.mxu0 0.0
    %419 = vmatpush1.msra.mxu0 0.0
    %420 = vmatprep.subr.mxu0 0.0
    %421 = vmatpush1.msra.mxu0 0.0
    %422 = vmatprep.subr.mxu0 0.0
    %423 = vmatpush1.msra.mxu0 0.0
    %424 = vmatprep.subr.mxu0 0.0
    %425 = vmatpush1.msra.mxu0 0.0
    %426 = vmatprep.subr.mxu0 0.0
    %427 = vmatpush1.msra.mxu0 0.0
    %428 = vmatprep.subr.mxu0 0.0
    %429 = vmatpush1.msra.mxu0 0.0
    %430 = vmatprep.subr.mxu0 0.0
    %431 = vmatpush1.msra.mxu0 0.0
    %432 = vmatprep.subr.mxu0 0.0
    %433 = vmatpush1.msra.mxu0 0.0
    %434 = vmatprep.subr.mxu0 0.0
    %435 = vmatpush1.msra.mxu0 0.0
    %436 = vmatprep.subr.mxu0 0.0
    %437 = vmatpush1.msra.mxu0 0.0
    %438 = vmatprep.subr.mxu0 0.0
    %439 = vmatpush1.msra.mxu0 0.0
    %440 = vmatprep.subr.mxu0 0.0
    %441 = vmatpush1.msra.mxu0 0.0
    %442 = vmatprep.subr.mxu0 0.0
    %443 = vmatpush1.msra.mxu0 0.0
    %444 = vmatprep.subr.mxu0 0.0
    %445 = vmatpush1.msra.mxu0 0.0
    %446 = vmatprep.subr.mxu0 0.0
    %447 = vmatpush1.msra.mxu0 0.0
    %448 = vmatprep.subr.mxu0 0.0
    %449 = vmatpush1.msra.mxu0 0.0
    %450 = vmatprep.subr.mxu0 0.0
    %451 = vmatpush1.msra.mxu0 0.0
    %452 = vmatprep.subr.mxu0 0.0
    %453 = vmatpush1.msra.mxu0 0.0
    %454 = vmatprep.mubr.f32.mxu0 0.0
    %455 = vmatmul.mubr.f32.gmra.mrb[0].mxu0 %v388
    %v456 = vpop.f32.mrb[0].mxu0
    %v457 = vadd.f32 %v385, %v456
    %v458 = vpop.f32.mrb[0].mxu0
    %459 = vdwg.mxu0
    %vm460 = vcmask 58368
    %461 = vst.msk [vmem:[#allocation5] sm:$0x3] %vm460, %v457
    // Predicated region
    $region42: #{bilstm_forward.1} parent=1 // pred_check
      _
    $region43: #{bilstm_forward.1} parent=1 // pred_check_branch
      %463 = sbr.rel (0) target = $region45
    $region44: #{bilstm_forward.1} parent=1 // pred_region
      %s465 = ssub.s32 32, 32
      %466 = vsyncadd [#allocation4], %s465
      %s468 = sshll.u32 [#allocation5], 4
      %s469 = int_to_ptr.vmem [resolvable:$true] %s468
      %471 = dma.vmem_to_hbm [thread:$0]  %s469, 32, %s9, [#allocation4]
    $region45: #{bilstm_forward.1} parent=1 // pred_fallthru
      _
    // Predicated region
    $region46: #{bilstm_forward.1} parent=1 // pred_check
      _
    $region47: #{bilstm_forward.1} parent=1 // pred_check_branch
      %473 = sbr.rel (0) target = $region49
    $region48: #{bilstm_forward.1} parent=1 // pred_region
      %474 = dma.done [#allocation4], 32
    $region49: #{bilstm_forward.1} parent=1 // pred_fallthru
      _
    %475 = vsyncpa [#allocation3], 1
    %476 = vsyncpa [#allocation4], 1

</llo_original>
